<compile_context>
chip_gen: v5e
topology: v5e:2x2
jax: 0.10.0
libtpu: 0.0.40
codegen_flags: <defaults>
</compile_context>

<pallas_src>
import math

import jax
import jax.numpy as jnp
from jax.experimental import pallas as pl
from jax.experimental.pallas import tpu as pltpu


_LANE = 128
_TARGET_BUF_BYTES = 2 * 1024 * 1024  # ~2 MiB per x/out buffer (3 arrays x 2 buffers ~= 10-12 MiB)


def _round_up(x: int, m: int) -> int:
    return ((x + m - 1) // m) * m


def _posenc_kernel(x_ref, pe_ref, o_ref):
    # Single lane-aligned VPU add; pe broadcasts over the leading (batch) block dim.
    o_ref[...] = x_ref[...] + pe_ref[...]
    # TODO(synk): dropout with p=0.0 is an identity; non-zero dropout would need
    # pltpu.prng_seed/prng_random_bits masking, omitted to match p=0.0 exactly.


def make_pe(seq_length: int, hidden_size: int, dtype=jnp.float32) -> jnp.ndarray:
    """Deterministic sinusoidal positional-encoding table, shape (1, S, H).

    Built once at init (hoisted out of the per-call path). Note: carrying pe in the
    activation dtype differs from torch (which promotes bf16 + f32 buffer to f32)
    by at most activation-dtype rounding.
    """
    assert hidden_size % 2 == 0, (
        "hidden_size must be even (same latent constraint as the torch module)")
    position = jnp.arange(0, seq_length, dtype=jnp.float32)[:, None]           # (S, 1)
    div_term = jnp.exp(jnp.arange(0, hidden_size, 2, dtype=jnp.float32)
                       * (-math.log(10000.0) / hidden_size))                   # (H//2,)
    ang = position * div_term                                                   # (S, H//2)
    pe = jnp.zeros((seq_length, hidden_size), dtype=jnp.float32)
    pe = pe.at[:, 0::2].set(jnp.sin(ang))
    pe = pe.at[:, 1::2].set(jnp.cos(ang))
    return pe[None, :, :].astype(dtype)                                         # (1, S, H)


def positional_encoding(x: jnp.ndarray, pe: jnp.ndarray, *, donate_x: bool = False) -> jnp.ndarray:
    """x: (B, S, H), pe: (1, S, H). Returns x + pe (broadcast over batch)."""
    B, S, H = x.shape
    assert pe.shape == (1, S, H)

    if pe.dtype != x.dtype:
        # Prefer passing a pre-cast pe (make_pe(..., dtype=x.dtype)); this is a fallback.
        pe = pe.astype(x.dtype)

    itemsize = jnp.dtype(x.dtype).itemsize
    # dtype-aware second-to-last-dim multiple: f32 -> 8, bf16/f16 -> 16, int8/fp8 -> 32.
    sub = max(8, 32 // itemsize)

    io_alias = {0: 0} if donate_x else {}
    cparams = pltpu.CompilerParams(
        # Both axes are fully independent -> shard across v7x's 2 TensorCores; no-op on v5e/v6e.
        dimension_semantics=("parallel", "parallel"))

    if H % _LANE == 0:
        # ---- Path A: H lane-aligned. 3-D blocks, batch folded into the block. ----
        ts = min(S, max(sub, (_TARGET_BUF_BYTES // (H * itemsize)) // sub * sub))
        if ts >= S:
            ts = S                                    # full dim is always a legal block extent
        b_blk = max(1, min(B, _TARGET_BUF_BYTES // max(1, ts * H * itemsize)))
        grid = (pl.cdiv(S, ts), pl.cdiv(B, b_blk))    # batch innermost; ragged edges masked

        return pl.pallas_call(
            _posenc_kernel,
            out_shape=jax.ShapeDtypeStruct((B, S, H), x.dtype),
            grid_spec=pltpu.PrefetchScalarGridSpec(
                num_scalar_prefetch=0,
                grid=grid,
                in_specs=[
                    pl.BlockSpec((b_blk, ts, H), lambda s, b: (b, s, 0)),  # x tile
                    pl.BlockSpec((1, ts, H), lambda s, b: (0, s, 0)),      # shared pe tile
                ],
                out_specs=pl.BlockSpec((b_blk, ts, H), lambda s, b: (b, s, 0)),
            ),
            compiler_params=cparams,
            input_output_aliases=io_alias,
        )(x, pe)

    # ---- Path B: H not lane-aligned (e.g. H=784 default, H=32 test). Flatten trailing dims. ----
    # reshape is a free row-major metadata change; semantics unchanged (batch-only broadcast).
    N = S * H
    x2 = x.reshape(B, N)
    pe2 = pe.reshape(1, N)

    # Batch rows per block (sublane dim): whole batch if its padded footprint at 128 lanes is
    # tiny, else a multiple of `sub` sized to the byte target.
    if _round_up(B, sub) * _LANE * itemsize <= _TARGET_BUF_BYTES:
        b_blk = B
    else:
        b_blk = min(B, max(sub, (_TARGET_BUF_BYTES // (_LANE * itemsize)) // sub * sub))
    rows_pad = _round_up(b_blk, sub)                  # VMEM sublane padding accounted in budget
    tn = max(_LANE, (_TARGET_BUF_BYTES // (rows_pad * itemsize)) // _LANE * _LANE)
    if tn >= N:
        tn = N                                        # full dim is always a legal block extent
    grid = (pl.cdiv(N, tn), pl.cdiv(B, b_blk))        # ragged last blocks masked by Pallas

    out = pl.pallas_call(
        _posenc_kernel,
        out_shape=jax.ShapeDtypeStruct((B, N), x.dtype),
        grid_spec=pltpu.PrefetchScalarGridSpec(
            num_scalar_prefetch=0,
            grid=grid,
            in_specs=[
                pl.BlockSpec((b_blk, tn), lambda n, b: (b, n)),  # x tile (lane-dense)
                pl.BlockSpec((1, tn), lambda n, b: (0, n)),      # shared pe tile
            ],
            out_specs=pl.BlockSpec((b_blk, tn), lambda n, b: (b, n)),
        ),
        compiler_params=cparams,
        input_output_aliases=io_alias,
    )(x2, pe2)
    return out.reshape(B, S, H)


if __name__ == "__main__":
    # Small shapes consistent with the module: batch=2, seq_length=8, hidden_size=32
    B, S, H = 2, 8, 32
    key = jax.random.PRNGKey(0)
    x = jax.random.normal(key, (B, S, H), dtype=jnp.float32)

    pe = make_pe(S, H, dtype=x.dtype)           # built once, outside the hot path
    out = jax.block_until_ready(positional_encoding(x, pe))

    ref = x + pe                                 # same semantics as PyTorch forward with p=0.0
    assert out.shape == (B, S, H)
    assert jnp.allclose(out, ref, atol=1e-6), "mismatch vs reference (flattened path)"

    # Also exercise the lane-aligned (H % 128 == 0) path.
    B2, S2, H2 = 2, 16, 128
    x2 = jax.random.normal(jax.random.PRNGKey(1), (B2, S2, H2), dtype=jnp.float32)
    pe2 = make_pe(S2, H2, dtype=x2.dtype)
    out2 = jax.block_until_ready(positional_encoding(x2, pe2))
    assert jnp.allclose(out2, x2 + pe2, atol=1e-6), "mismatch vs reference (aligned path)"

    print("KERNEL_OK")
</pallas_src>

<mosaic_0001>
module attributes {stable_mosaic.version = 11 : i64} {
  func.func @_posenc_kernel(%arg0: i32, %arg1: i32, %arg2: memref<2x256xf32, #tpu.memory_space<vmem>>, %arg3: memref<1x256xf32, #tpu.memory_space<vmem>>, %arg4: memref<2x256xf32, #tpu.memory_space<vmem>>) attributes {dimension_semantics = [#tpu.dimension_semantics<parallel>, #tpu.dimension_semantics<parallel>], iteration_bounds = array<i64: 1, 1>, scalar_prefetch = 0 : i64, scratch_operands = 0 : i64, tpu.core_type = #tpu.core_type<tc>, window_params = [{transform_indices = @transform_0, window_bounds = array<i64: 2, 256>}, {transform_indices = @transform_1, window_bounds = array<i64: 1, 256>}, {transform_indices = @transform_2, window_bounds = array<i64: 2, 256>}]} {
    %c0 = arith.constant 0 : index
    %c0_0 = arith.constant 0 : index
    %0 = vector.load %arg2[%c0, %c0_0] : memref<2x256xf32, #tpu.memory_space<vmem>>, vector<2x256xf32>
    %c0_1 = arith.constant 0 : index
    %c0_2 = arith.constant 0 : index
    %1 = vector.load %arg3[%c0_1, %c0_2] : memref<1x256xf32, #tpu.memory_space<vmem>>, vector<1x256xf32>
    %2 = vector.broadcast %1 : vector<1x256xf32> to vector<2x256xf32>
    %3 = arith.addf %0, %2 : vector<2x256xf32>
    %c0_3 = arith.constant 0 : index
    %c0_4 = arith.constant 0 : index
    %4 = vector.load %arg4[%c0_3, %c0_4] : memref<2x256xf32, #tpu.memory_space<vmem>>, vector<2x256xf32>
    tpu.vector_store %arg4[%c0_3, %c0_4], %3 {strides = array<i32>} : memref<2x256xf32, #tpu.memory_space<vmem>>, vector<2x256xf32>,
    return
  }
  func.func @transform_0(%arg0: i32, %arg1: i32) -> (i32, i32) {
    %c0_i32 = arith.constant 0 : i32
    return %arg1, %arg0 : i32, i32
  }
  func.func @transform_1(%arg0: i32, %arg1: i32) -> (i32, i32) {
    %c0_i32 = arith.constant 0 : i32
    %c0_i32_0 = arith.constant 0 : i32
    return %c0_i32, %arg0 : i32, i32
  }
  func.func @transform_2(%arg0: i32, %arg1: i32) -> (i32, i32) {
    %c0_i32 = arith.constant 0 : i32
    return %arg1, %arg0 : i32, i32
  }
}

</mosaic_0001>

<llo_original>
// kernel: tpu_custom_call.1
$region0: #{tpu_custom_call.1}
  #allocation0 [shape = 'u32[]', space=smem, size = 0x4, offset = 0x4, fixed_abs, tag = 'smem constant byte address 0x4 - core index']
  #allocation1 [shape = 'u32[72,128]{1,0:T(1,128)}', space=vmem, size = 0x9000, scoped, tag = 'internal scratch']
  %s0 = inlined_call_operand.hbm [shape: f32[2,256], index: 0, kind: input, shape index: {}]
  %s1 = inlined_call_operand.hbm [shape: f32[1,256], index: 1, kind: input, shape index: {}]
  %s2 = inlined_call_operand.hbm [shape: f32[2,256], index: 2, kind: output, shape index: {}]
  %s3 = sld [smem:[#allocation0]]
  $region26: #{tpu_custom_call.1} parent=0
    _
  %s5 = ssub.s32 1, %s3
  %s6 = scalar_select 0, %s5, %s3
  $region1: #{tpu_custom_call.1} parent=0
    #allocation2 [shape = 'u8[2048]{0}', space=vmem, size = 0x800, scoped, tag = 'input window, operand 0, single buffered']
    #allocation3 [shape = 's32[1]{0}', space=sflag, size = 0x4, scoped, tag = 'scoped memory for tpu_custom_call.1']
    #allocation4 [shape = 's32[1]{0}', space=sflag, size = 0x4, scoped, tag = 'scoped memory for tpu_custom_call.1']
    #allocation5 [shape = 'u8[1024]{0}', space=vmem, size = 0x400, scoped, tag = 'input window, operand 1, single buffered']
    #allocation6 [shape = 's32[1]{0}', space=sflag, size = 0x4, scoped, tag = 'scoped memory for tpu_custom_call.1']
    #allocation7 [shape = 'u8[2048]{0}', space=vmem, size = 0x800, scoped, tag = 'output window, operand 0, single buffered']
    %7 = vsyncpa [#allocation3], 0
    %8 = vsyncpa [#allocation6], 0
    %9 = vsyncpa [#allocation4], 0
    // Predicated region
    $region2: #{tpu_custom_call.1} parent=1 // pred_check
      _
    $region3: #{tpu_custom_call.1} parent=1 // pred_check_branch
      %11 = sbr.rel (0) target = $region5
    $region4: #{tpu_custom_call.1} parent=1 // pred_region
      %13 = vsyncadd [#allocation3], 0
      %s15 = sshll.u32 %s0, 4
      %s16 = int_to_ptr.hbm [resolvable:$true] %s15
      %s17 = sshll.u32 [#allocation2], 4
      %s18 = int_to_ptr.vmem [resolvable:$true] %s17
      %20 = dma.hbm_to_vmem [thread:$0]  %s16, 64, %s18, [#allocation3]
    $region5: #{tpu_custom_call.1} parent=1 // pred_fallthru
      _
    // Predicated region
    $region6: #{tpu_custom_call.1} parent=1 // pred_check
      _
    $region7: #{tpu_custom_call.1} parent=1 // pred_check_branch
      %22 = sbr.rel (0) target = $region9
    $region8: #{tpu_custom_call.1} parent=1 // pred_region
      %24 = vsyncadd [#allocation6], 0
      %s26 = sshll.u32 %s1, 4
      %s27 = int_to_ptr.hbm [resolvable:$true] %s26
      %s28 = sshll.u32 [#allocation5], 4
      %s29 = int_to_ptr.vmem [resolvable:$true] %s28
      %31 = dma.hbm_to_vmem [thread:$0]  %s27, 32, %s29, [#allocation6]
    $region9: #{tpu_custom_call.1} parent=1 // pred_fallthru
      _
    // Predicated region
    $region10: #{tpu_custom_call.1} parent=1 // pred_check
      _
    $region11: #{tpu_custom_call.1} parent=1 // pred_check_branch
      %33 = sbr.rel (0) target = $region13
    $region12: #{tpu_custom_call.1} parent=1 // pred_region
      %35 = dma.done [#allocation3], 64
    $region13: #{tpu_custom_call.1} parent=1 // pred_fallthru
      _
    // Predicated region
    $region14: #{tpu_custom_call.1} parent=1 // pred_check
      _
    $region15: #{tpu_custom_call.1} parent=1 // pred_check_branch
      %37 = sbr.rel (0) target = $region17
    $region16: #{tpu_custom_call.1} parent=1 // pred_region
      %39 = dma.done [#allocation6], 32
    $region17: #{tpu_custom_call.1} parent=1 // pred_fallthru
      _
    %v40 = vld [vmem:[#allocation2] sm:$0xf]
    %v41 = vld [vmem:[#allocation5] sm:$0x3]
    %v43 = vperm.slane %v41, 0
    %v44 = vperm.slane %v41, 1
    %v45 = vrot.slane %v44, 6
    %vm46 = vcmask 1041408
    %v47 = vsel %vm46, %v43, %v45
    %v49 = vadd.f32 %v40, %v47
    %50 = vst [vmem:[#allocation7] sm:$0xf] %v49
    // Predicated region
    $region18: #{tpu_custom_call.1} parent=1 // pred_check
      _
    $region19: #{tpu_custom_call.1} parent=1 // pred_check_branch
      %52 = sbr.rel (0) target = $region21
    $region20: #{tpu_custom_call.1} parent=1 // pred_region
      %54 = vsyncadd [#allocation4], 0
      %s56 = sshll.u32 [#allocation7], 4
      %s57 = int_to_ptr.vmem [resolvable:$true] %s56
      %s58 = sshll.u32 %s2, 4
      %s59 = int_to_ptr.hbm [resolvable:$true] %s58
      %61 = dma.vmem_to_hbm [thread:$0]  %s57, 64, %s59, [#allocation4]
    $region21: #{tpu_custom_call.1} parent=1 // pred_fallthru
      _
    // Predicated region
    $region22: #{tpu_custom_call.1} parent=1 // pred_check
      _
    $region23: #{tpu_custom_call.1} parent=1 // pred_check_branch
      %63 = sbr.rel (0) target = $region25
    $region24: #{tpu_custom_call.1} parent=1 // pred_region
      %65 = dma.done [#allocation4], 64
    $region25: #{tpu_custom_call.1} parent=1 // pred_fallthru
      _
    %66 = vsyncpa [#allocation3], 1
    %67 = vsyncpa [#allocation6], 1
    %68 = vsyncpa [#allocation4], 1

</llo_original>
